<compile_context>
chip_gen: v7x
topology: tpu7x:2x2x1
jax: 0.10.0
libtpu: 0.0.40
codegen_flags: <defaults>
</compile_context>

<pallas_src>
import jax
import jax.numpy as jnp
from jax.experimental import pallas as pl
from jax.experimental.pallas import tpu as pltpu


# --------------------------- operator folding (tiny, plain JAX) --------------
def _build_fused_operator(supports, w, b, order=2):
    """Fold [I, A_s^p] with the 1x1-conv weight slices + bias.

    Returns K2 of shape (Cout*V, C*V) and bias b2 of shape (Cout*V, 1) such
    that  out[n].reshape(Cout*V, L) = K2 @ x[n].reshape(C*V, L) + b2.
    """
    Cout, Ccat = w.shape
    V = supports[0].shape[0]
    G = order * len(supports)
    C = Ccat // (G + 1)

    eye = jnp.eye(V, dtype=jnp.float32)
    w32 = w.astype(jnp.float32)
    # K[o, w_, c, v]:  out[o, w_, l] = sum_{c,v} K[o, w_, c, v] * x[c, v, l]
    K = w32[:, :C][:, None, :, None] * eye[None, :, None, :]      # group 0: x itself
    g = 1
    for A in supports:                 # torch concat order: s0 p1..P, s1 p1..P, ...
        A32 = A.astype(jnp.float32)    # A^p chain kept in f32
        Ap = A32
        for p in range(1, order + 1):
            if p > 1:
                Ap = Ap @ A32          # A^p  (tiny VxV, done once)
            Wg = w32[:, g * C:(g + 1) * C]                        # (Cout, C)
            K = K + Wg[:, None, :, None] * Ap.T[None, :, None, :]
            g += 1

    K2 = K.reshape(Cout * V, C * V)
    b2 = jnp.repeat(b.astype(jnp.float32), V).reshape(Cout * V, 1)
    return K2, b2


# ------------------------------ fused kernel ---------------------------------
def _gcn_fused_kernel(x_ref, k_ref, b_ref, o_ref):
    # (Cout*V, C*V) @ (C*V, tile_l) + bias  -- time axis lane-dense, f32 acc.
    acc = jnp.dot(k_ref[...], x_ref[...], preferred_element_type=jnp.float32)
    o_ref[...] = (acc + b_ref[...]).astype(o_ref.dtype)


# ------------------------------ tile sizing ----------------------------------
def _choose_tile_l(L_pad, N, cv, cout_v, in_bytes, out_bytes,
                   buffer_budget_bytes=24 << 20, tl_cap=8192):
    """Largest multiple-of-128 time tile whose double-buffered in+out working
    set fits the VMEM buffer budget (fits v5e's 16 MiB scoped default after
    the explicit vmem_limit bump), capped, and split so the grid has >=2 total
    steps when possible (v7x 2-TC megacore)."""
    per_lane = 2 * (cv * in_bytes + cout_v * out_bytes)   # double-buffered bytes / lane
    tl = (buffer_budget_bytes // per_lane) // 128 * 128
    tl = max(128, min(int(tl), tl_cap, L_pad))
    if N * ((L_pad + tl - 1) // tl) < 2 and L_pad >= 256:
        half = ((L_pad // 2) + 127) // 128 * 128
        tl = max(128, min(tl, half))
    return tl


# ------------------------------ gcn forward ----------------------------------
def gcn_forward(x, supports, w, b, *, order=2, out_dtype=jnp.float32,
                buffer_budget_bytes=24 << 20):
    """gcn.forward (eval mode).

    x: (N, C, V, L) -- operand dtype follows x.dtype (feed bf16 x for the
       bandwidth lever; x is NEVER cast inside this wrapper, that would add a
       full extra HBM pass over x).
    supports: list of (V, V); w: (Cout, (order*S+1)*C); b: (Cout,).
    out_dtype: output dtype (f32 default; bf16 opt-in halves the writeback).
    """
    N, C, V, L = x.shape
    Cout = w.shape[0]

    K2, b2 = _build_fused_operator(supports, w, b, order=order)
    K2 = K2.astype(x.dtype)            # tiny; bf16 x -> bf16 MXU operands

    # Lane-dense time axis: pad ragged L to the next multiple of 128 so every
    # store is an unmasked, full-lane vst (cheap; only matters for small L).
    L_pad = ((L + 127) // 128) * 128
    x2 = x.reshape(N, C * V, L)        # free reshape; native layout kept
    if L_pad != L:
        x2 = jnp.pad(x2, ((0, 0), (0, 0), (0, L_pad - L)))

    in_bytes = jnp.dtype(x.dtype).itemsize
    out_bytes = jnp.dtype(out_dtype).itemsize
    tl = _choose_tile_l(L_pad, N, C * V, Cout * V, in_bytes, out_bytes,
                        buffer_budget_bytes=buffer_budget_bytes)
    grid = (N, pl.cdiv(L_pad, tl))

    # Explicit VMEM limit: raises v5e's 16 MiB scoped default, stays well under
    # v7x's 64 MiB physical VMEM.
    k2_bytes = K2.size * K2.dtype.itemsize
    b2_bytes = b2.size * b2.dtype.itemsize
    need = (2 * (C * V) * tl * in_bytes + 2 * (Cout * V) * tl * out_bytes
            + 2 * k2_bytes + 2 * b2_bytes)
    vmem_limit = int(min(max(need + (4 << 20), 32 << 20), 48 << 20))

    cost = pl.CostEstimate(
        flops=2 * N * (Cout * V) * (C * V) * L_pad,
        transcendentals=0,
        bytes_accessed=(N * (C * V) * L_pad * in_bytes + k2_bytes + b2_bytes
                        + N * (Cout * V) * L_pad * out_bytes))

    out2 = pl.pallas_call(
        _gcn_fused_kernel,
        out_shape=jax.ShapeDtypeStruct((N, Cout * V, L_pad), out_dtype),
        grid=grid,
        in_specs=[
            pl.BlockSpec((None, C * V, tl), lambda n, t: (n, 0, t)),   # x tile
            pl.BlockSpec((Cout * V, C * V), lambda n, t: (0, 0)),      # folded op (VMEM-resident)
            pl.BlockSpec((Cout * V, 1), lambda n, t: (0, 0)),          # bias
        ],
        out_specs=pl.BlockSpec((None, Cout * V, tl), lambda n, t: (n, 0, t)),
        compiler_params=pltpu.CompilerParams(
            dimension_semantics=("parallel", "parallel"),
            vmem_limit_bytes=vmem_limit),
        cost_estimate=cost,
    )(x2, K2, b2)

    if L_pad != L:
        out2 = out2[:, :, :L]
    # TODO(synk): F.dropout applied in inference mode (identity); training-mode
    # dropout cannot be reproduced bit-exactly against the torch RNG.
    return out2.reshape(N, Cout, V, L)


# ------------------------------ pure-JAX ref ----------------------------------
def _reference(x, supports, w, b, order=2):
    out = [x]
    for a in supports:
        x1 = jnp.einsum('ncvl,vw->ncwl', x, a)
        out.append(x1)
        for _ in range(2, order + 1):
            x2 = jnp.einsum('ncvl,vw->ncwl', x1, a)
            out.append(x2)
            x1 = x2
    h = jnp.concatenate(out, axis=1)
    return jnp.einsum('oc,ncvl->novl', w, h) + b[None, :, None, None]


if __name__ == "__main__":
    key = jax.random.PRNGKey(0)
    N, c_in, V, L = 2, 4, 8, 256
    support_len, order = 3, 2
    c_out = 6
    c_cat = (order * support_len + 1) * c_in   # = 28

    keys = jax.random.split(key, 3 + support_len)
    x = jax.random.normal(keys[0], (N, c_in, V, L), dtype=jnp.float32)
    supports = [0.1 * jax.random.normal(keys[3 + i], (V, V), dtype=jnp.float32)
                for i in range(support_len)]
    # Conv2d(c_cat, c_out, kernel_size=(1,1), bias=True): weight (c_out, c_cat, 1, 1)
    w = 0.1 * jax.random.normal(keys[1], (c_out, c_cat), dtype=jnp.float32)
    b = jax.random.normal(keys[2], (c_out,), dtype=jnp.float32)

    ref = _reference(x, supports, w, b, order=order)

    # f32 path (matches PyTorch semantics within tight tolerance).
    out = jax.block_until_ready(gcn_forward(x, supports, w, b, order=order))
    assert out.shape == (N, c_out, V, L), out.shape
    assert jnp.allclose(out, ref, atol=1e-4, rtol=1e-4)

    # Ragged-L path: L not a multiple of 128 -> padded in the wrapper so the
    # kernel still issues lane-dense stores.
    Lr = 100
    out_r = jax.block_until_ready(
        gcn_forward(x[..., :Lr], supports, w, b, order=order))
    assert out_r.shape == (N, c_out, V, Lr), out_r.shape
    assert jnp.allclose(out_r, ref[..., :Lr], atol=1e-4, rtol=1e-4)

    # bf16 operand + bf16 output path (bandwidth lever on v5e/v6e/v7x):
    # x is ALREADY bf16 in HBM -- no wrapper-side cast; f32 accumulation.
    x_bf16 = x.astype(jnp.bfloat16)
    out_bf16 = jax.block_until_ready(
        gcn_forward(x_bf16, supports, w, b, order=order, out_dtype=jnp.bfloat16))
    assert out_bf16.dtype == jnp.bfloat16
    assert jnp.allclose(out_bf16.astype(jnp.float32), ref, atol=5e-2, rtol=5e-2)

    print("KERNEL_OK")
</pallas_src>

<mosaic_0001>
module attributes {stable_mosaic.version = 11 : i64} {
  func.func @_gcn_fused_kernel(%arg0: i32, %arg1: i32, %arg2: memref<1x32x256xf32, #tpu.memory_space<vmem>>, %arg3: memref<48x32xf32, #tpu.memory_space<vmem>>, %arg4: memref<48x1xf32, #tpu.memory_space<vmem>>, %arg5: memref<1x48x256xf32, #tpu.memory_space<vmem>>) attributes {dimension_semantics = [#tpu.dimension_semantics<parallel>, #tpu.dimension_semantics<parallel>], iteration_bounds = array<i64: 2, 1>, scalar_prefetch = 0 : i64, scratch_operands = 0 : i64, tpu.core_type = #tpu.core_type<tc>, window_params = [{transform_indices = @transform_0, window_bounds = array<i64: 1, 32, 256>}, {pipeline_mode = #tpu.pipeline_mode<synchronous>, transform_indices = @transform_1, window_bounds = array<i64: 48, 32>}, {pipeline_mode = #tpu.pipeline_mode<synchronous>, transform_indices = @transform_2, window_bounds = array<i64: 48, 1>}, {transform_indices = @transform_3, window_bounds = array<i64: 1, 48, 256>}]} {
    %c0 = arith.constant 0 : index
    %c0_0 = arith.constant 0 : index
    %0 = vector.load %arg3[%c0, %c0_0] : memref<48x32xf32, #tpu.memory_space<vmem>>, vector<48x32xf32>
    %c0_1 = arith.constant 0 : index
    %c0_2 = arith.constant 0 : index
    %c0_3 = arith.constant 0 : index
    %1 = vector.load %arg2[%c0_1, %c0_2, %c0_3] : memref<1x32x256xf32, #tpu.memory_space<vmem>>, vector<1x32x256xf32>
    %2 = vector.shape_cast %1 : vector<1x32x256xf32> to vector<32x256xf32>
    %cst = arith.constant dense<0.000000e+00> : vector<48x256xf32>
    %3 = tpu.matmul %0, %2, %cst {dimension_numbers = #tpu.dot_dimension_numbers<[1], [0], [0], [1], [0, 0, 1, 1], [], []>} : vector<48x32xf32>, vector<32x256xf32>, vector<48x256xf32> -> vector<48x256xf32>
    %c0_4 = arith.constant 0 : index
    %c0_5 = arith.constant 0 : index
    %4 = vector.load %arg4[%c0_4, %c0_5] : memref<48x1xf32, #tpu.memory_space<vmem>>, vector<48x1xf32>
    %5 = vector.broadcast %4 : vector<48x1xf32> to vector<48x256xf32>
    %6 = arith.addf %3, %5 : vector<48x256xf32>
    %c0_6 = arith.constant 0 : index
    %c0_7 = arith.constant 0 : index
    %c0_8 = arith.constant 0 : index
    %7 = vector.load %arg5[%c0_6, %c0_7, %c0_8] : memref<1x48x256xf32, #tpu.memory_space<vmem>>, vector<1x48x256xf32>
    %8 = vector.shape_cast %7 : vector<1x48x256xf32> to vector<48x256xf32>
    %9 = vector.shape_cast %6 : vector<48x256xf32> to vector<1x48x256xf32>
    tpu.vector_store %arg5[%c0_6, %c0_7, %c0_8], %9 {strides = array<i32>} : memref<1x48x256xf32, #tpu.memory_space<vmem>>, vector<1x48x256xf32>,
    return
  }
  func.func @transform_0(%arg0: i32, %arg1: i32) -> (i32, i32, i32) {
    %c0_i32 = arith.constant 0 : i32
    %c0_i32_0 = arith.constant 0 : i32
    return %arg0, %c0_i32, %arg1 : i32, i32, i32
  }
  func.func @transform_1(%arg0: i32, %arg1: i32) -> (i32, i32) {
    %c0_i32 = arith.constant 0 : i32
    %c0_i32_0 = arith.constant 0 : i32
    %c0_i32_1 = arith.constant 0 : i32
    return %c0_i32, %c0_i32_0 : i32, i32
  }
  func.func @transform_2(%arg0: i32, %arg1: i32) -> (i32, i32) {
    %c0_i32 = arith.constant 0 : i32
    %c0_i32_0 = arith.constant 0 : i32
    %c0_i32_1 = arith.constant 0 : i32
    return %c0_i32, %c0_i32_0 : i32, i32
  }
  func.func @transform_3(%arg0: i32, %arg1: i32) -> (i32, i32, i32) {
    %c0_i32 = arith.constant 0 : i32
    %c0_i32_0 = arith.constant 0 : i32
    return %arg0, %c0_i32, %arg1 : i32, i32, i32
  }
}

</mosaic_0001>

<llo_original>
// kernel: tpu_custom_call.1
$region0: #{tpu_custom_call.1}
  #allocation0 [shape = 'u32[]', space=smem, size = 0x4, offset = 0x4, fixed_abs, tag = 'smem constant byte address 0x4 - core index']
  #allocation1 [shape = 'u32[144,128]{1,0:T(1,128)}', space=vmem, size = 0x12000, scoped, tag = 'internal scratch']
  %s0 = inlined_call_operand.vmem [shape: f32[2,32,256], index: 0, kind: input, shape index: {}]
  %s1 = inlined_call_operand.vmem [shape: f32[48,32], index: 1, kind: input, shape index: {}]
  %s2 = inlined_call_operand.vmem [shape: f32[48,1], index: 2, kind: input, shape index: {}]
  %s3 = inlined_call_operand.hbm [shape: f32[2,48,256], index: 3, kind: output, shape index: {}]
  %s4 = sld [smem:[#allocation0]]
  $region45: #{tpu_custom_call.1} parent=0
    _
  %s6 = ssub.s32 1, %s4
  %s7 = scalar_select 0, %s6, %s4
  $region1: #{tpu_custom_call.1} parent=0
    #allocation2 [shape = 'u8[98304]{0}', space=vmem, size = 0x18000, scoped, tag = 'output window, operand 0']
    #allocation3 [shape = 's32[2]{0}', space=sflag, size = 0x8, scoped, tag = 'scoped memory for tpu_custom_call.1']
    %8 = vsyncpa [#allocation3], 0
    %s9 = scalar_lea.sflag [#allocation3], 1
    %10 = vsyncpa %s9, 0
    loop: start=0, step=1, limit=4
    $region2: #{tpu_custom_call.1} parent=1 // loop_pre_header
      _
    $region3: #{tpu_custom_call.1} parent=1 // loop_header
      %s12 = sphi 0, %s16
      %p13 = scmp.ge.s32.totalorder %s12, 4
      %s19 = sphi 0, %s31
      %s20 = sphi 0, %s27
      %s21 = sphi 0, %s19
      %s22 = sphi 0, %s20
      %s23 = sphi 0, %s21
      %s24 = sphi 0, %s22
      %s36 = sphi 0, %s38
      %s39 = sphi 0, %s36
      %s40 = sphi 0, %s39
      %s56 = sphi 0, %s40
      %s60 = sphi 0, %s60
      %s62 = sphi 0, %s60
      %s63 = sphi 0, %s62
      %s77 = sphi 0, %s63
      %s81 = sphi 0, %s81
      %s83 = sphi 0, %s81
      %s84 = sphi 0, %s83
      %s98 = sphi 0, %s84
      %s106 = sphi 0, %s108
      %s109 = sphi 0, %s106
      %s110 = sphi 0, %s109
      %s126 = sphi 0, %s110
    $region4: #{tpu_custom_call.1} parent=1 // loop_header_branch
      %15 = sbr.rel (%p13) target = $region8
    $region5: #{tpu_custom_call.1} parent=1 // loop_body
      %s17 = ssub.s32 %s12, 1
      %s18 = ssub.s32 %s12, 2
      %s25 = sadd.s32 1, %s20
      %p26 = scmp.ge.s32.totalorder %s25, 1
      %s27 = scalar_select %p26, 0, %s25
      %s28 = sadd.s32 1, %s19
      %s29 = scalar_select %p26, %s28, %s19
      %p30 = scmp.ge.s32.totalorder %s29, 2
      %s31 = scalar_select %p30, 0, %s29
      %s32 = ssub.s32 %s19, %s31
      %s33 = ssub.s32 %s20, %s27
      %s34 = sor.u32 %s32, %s33
      %p35 = scmp.eq.s32.totalorder %s34, 0
      %s37 = sadd.s32 %s36, 1
      %s38 = scalar_select %p35, %s36, %s37
      %p41 = pneg %p35
      %p42 = scmp.eq.s32.totalorder %s12, 1
      %p43 = por %p41, %p42
      %p44 = scmp.ne.s32.totalorder %s36, %s39
      %p45 = scmp.eq.s32.totalorder %s12, 0
      %p46 = por %p44, %p45
      %p47 = scmp.ne.s32.totalorder %s36, %s39
      %p48 = scmp.eq.s32.totalorder %s17, 1
      %p49 = por %p47, %p48
      %p50 = scmp.ne.s32.totalorder %s39, %s40
      %p51 = scmp.eq.s32.totalorder %s17, 0
      %p52 = por %p50, %p51
      %p53 = scmp.ne.s32.totalorder %s39, %s40
      %p54 = scmp.eq.s32.totalorder %s18, 1
      %p55 = por %p53, %p54
      %p57 = scmp.ne.s32.totalorder %s40, %s56
      %p58 = scmp.eq.s32.totalorder %s18, 0
      %p59 = por %p57, %p58
      %s61 = sadd.s32 %s60, 1
      %p64 = scmp.eq.s32.totalorder %s12, 1
      %p65 = scmp.ne.s32.totalorder %s60, %s62
      %p66 = scmp.eq.s32.totalorder %s12, 0
      %p67 = por %p65, %p66
      %p68 = scmp.ne.s32.totalorder %s60, %s62
      %p69 = scmp.eq.s32.totalorder %s17, 1
      %p70 = por %p68, %p69
      %p71 = scmp.ne.s32.totalorder %s62, %s63
      %p72 = scmp.eq.s32.totalorder %s17, 0
      %p73 = por %p71, %p72
      %p74 = scmp.ne.s32.totalorder %s62, %s63
      %p75 = scmp.eq.s32.totalorder %s18, 1
      %p76 = por %p74, %p75
      %p78 = scmp.ne.s32.totalorder %s63, %s77
      %p79 = scmp.eq.s32.totalorder %s18, 0
      %p80 = por %p78, %p79
      %s82 = sadd.s32 %s81, 1
      %p85 = scmp.eq.s32.totalorder %s12, 1
      %p86 = scmp.ne.s32.totalorder %s81, %s83
      %p87 = scmp.eq.s32.totalorder %s12, 0
      %p88 = por %p86, %p87
      %p89 = scmp.ne.s32.totalorder %s81, %s83
      %p90 = scmp.eq.s32.totalorder %s17, 1
      %p91 = por %p89, %p90
      %p92 = scmp.ne.s32.totalorder %s83, %s84
      %p93 = scmp.eq.s32.totalorder %s17, 0
      %p94 = por %p92, %p93
      %p95 = scmp.ne.s32.totalorder %s83, %s84
      %p96 = scmp.eq.s32.totalorder %s18, 1
      %p97 = por %p95, %p96
      %p99 = scmp.ne.s32.totalorder %s84, %s98
      %p100 = scmp.eq.s32.totalorder %s18, 0
      %p101 = por %p99, %p100
      %s102 = ssub.s32 %s19, %s31
      %s103 = ssub.s32 %s20, %s27
      %s104 = sor.u32 %s102, %s103
      %p105 = scmp.eq.s32.totalorder %s104, 0
      %s107 = sadd.s32 %s106, 1
      %s108 = scalar_select %p105, %s106, %s107
      %p111 = pneg %p105
      %p112 = scmp.eq.s32.totalorder %s12, 1
      %p113 = por %p111, %p112
      %p114 = scmp.ne.s32.totalorder %s106, %s109
      %p115 = scmp.eq.s32.totalorder %s12, 0
      %p116 = por %p114, %p115
      %p117 = scmp.ne.s32.totalorder %s106, %s109
      %p118 = scmp.eq.s32.totalorder %s17, 1
      %p119 = por %p117, %p118
      %p120 = scmp.ne.s32.totalorder %s109, %s110
      %p121 = scmp.eq.s32.totalorder %s17, 0
      %p122 = por %p120, %p121
      %p123 = scmp.ne.s32.totalorder %s109, %s110
      %p124 = scmp.eq.s32.totalorder %s18, 1
      %p125 = por %p123, %p124
      %p127 = scmp.ne.s32.totalorder %s110, %s126
      %p128 = scmp.eq.s32.totalorder %s18, 0
      %p129 = por %p127, %p128
      %p130 = scmp.le.s32.totalorder 1, %s12
      %p131 = scmp.lt.s32.totalorder %s12, 3
      %p132 = pnand %p130, %p131
      %p133 = pneg %p132
      // Predicated region
      $region9: #{tpu_custom_call.1} parent=5 // pred_check
        _
      $region10: #{tpu_custom_call.1} parent=5 // pred_check_branch
        %135 = sbr.rel (%p132) target = $region12
      $region11: #{tpu_custom_call.1} parent=5 // pred_region
        %s136 = ssub.s32 %s12, 1
        // Predicated region
        $region13: #{tpu_custom_call.1} parent=11 // pred_check
          %p137 = pneg %p73
        $region14: #{tpu_custom_call.1} parent=11 // pred_check_branch
          %139 = sbr.rel (%p137) target = $region16
        $region15: #{tpu_custom_call.1} parent=11 // pred_region
          _
        $region16: #{tpu_custom_call.1} parent=11 // pred_fallthru
          _
        // Predicated region
        $region17: #{tpu_custom_call.1} parent=11 // pred_check
          %p140 = pneg %p94
        $region18: #{tpu_custom_call.1} parent=11 // pred_check_branch
          %142 = sbr.rel (%p140) target = $region20
        $region19: #{tpu_custom_call.1} parent=11 // pred_region
          _
        $region20: #{tpu_custom_call.1} parent=11 // pred_fallthru
          _
      $region12: #{tpu_custom_call.1} parent=5 // pred_fallthru
        _
      %p143 = scmp.lt.s32.totalorder %s12, 2
      // Predicated region
      $region21: #{tpu_custom_call.1} parent=5 // pred_check
        %p144 = pneg %p143
      $region22: #{tpu_custom_call.1} parent=5 // pred_check_branch
        %146 = sbr.rel (%p144) target = $region24
      $region23: #{tpu_custom_call.1} parent=5 // pred_region
        // Predicated region
        $region25: #{tpu_custom_call.1} parent=23 // pred_check
          %p147 = pneg %p46
        $region26: #{tpu_custom_call.1} parent=23 // pred_check_branch
          %149 = sbr.rel (%p147) target = $region28
        $region27: #{tpu_custom_call.1} parent=23 // pred_region
          %s150 = smul.u32 2, %s20
          %p151 = scmp.lt.s32.totalorder %s19, 1
          %s152 = scalar_select %p151, %s19, 1
          %p153 = scmp.lt.s32.totalorder %s150, 1
          %s154 = scalar_select %p153, %s150, 1
          %s155 = smul.addr %s152, 8
          %s156 = sadd.s32 %s154, %s155
          %s157 = smul.addr %s156, 8
          %s158 = scalar_lea.vmem %s0, %s157
          %s159 = smul.u32 2, %s20
        $region28: #{tpu_custom_call.1} parent=23 // pred_fallthru
          _
      $region24: #{tpu_custom_call.1} parent=5 // pred_fallthru
        _
      %p160 = scmp.le.s32.totalorder 1, %s12
      %p161 = scmp.lt.s32.totalorder %s12, 3
      %p162 = pnand %p160, %p161
      %p163 = pneg %p162
      // Predicated region
      $region29: #{tpu_custom_call.1} parent=5 // pred_check
        _
      $region30: #{tpu_custom_call.1} parent=5 // pred_check_branch
        %165 = sbr.rel (%p162) target = $region32
      $region31: #{tpu_custom_call.1} parent=5 // pred_region
        %s166 = ssub.s32 %s12, 1
        %s167 = smul.u32 2, %s22
        %p168 = scmp.lt.s32.totalorder %s21, 1
        %s169 = scalar_select %p168, %s21, 1
        %p170 = scmp.lt.s32.totalorder %s167, 1
        %s171 = scalar_select %p170, %s167, 1
        %s172 = smul.addr %s169, 8
        %s173 = sadd.s32 %s171, %s172
        %s174 = smul.addr %s173, 8
        %s175 = scalar_lea.vmem %s0, %s174
        %p176 = pneg %p52
        %p177 = pneg %p49
        %p178 = pneg %p73
        %p179 = pneg %p70
        %p180 = pneg %p94
        %p181 = pneg %p91
        %p182 = pneg %p122
        %p183 = pneg %p119
        %s184 = sand.u32 %s109, 1
        %s185 = scalar_lea.sflag [#allocation3], %s184
        %s186 = sand.u32 %s109, 1
        %s187 = smul.addr %s186, 96
        %s188 = scalar_lea.vmem [#allocation2], %s187
        %s189 = smul.u32 2, %s22
        %p190 = scmp.lt.s32.totalorder %s21, 1
        %s191 = scalar_select %p190, %s21, 1
        %p192 = scmp.lt.s32.totalorder %s189, 1
        %s193 = scalar_select %p192, %s189, 1
        %s194 = smul.addr %s191, 8
        %s195 = sadd.s32 %s193, %s194
        %s196 = smul.addr %s195, 8
        %s197 = scalar_lea.vmem %s0, %s196
        %s198 = smul.u32 2, %s22
        %s199 = smul.u32 2, %s22
        %v200 = vld [vmem:[%s1] sm:$0xff]
        %v201 = vld [vmem:[%s1 + $0x8] sm:$0xff]
        %v202 = vld [vmem:[%s1 + $0x10] sm:$0xff]
        %v203 = vld [vmem:[%s1 + $0x18] sm:$0xff]
        %v204 = vld [vmem:[%s1 + $0x20] sm:$0xff]
        %v205 = vld [vmem:[%s1 + $0x28] sm:$0xff]
        %v206 = vld [vmem:[%s197] sm:$0xff]
        %v207 = vld [vmem:[%s197 + $0x8] sm:$0xff]
        %v208 = vld [vmem:[%s197 + $0x10] sm:$0xff]
        %v209 = vld [vmem:[%s197 + $0x18] sm:$0xff]
        %v210 = vld [vmem:[%s197 + $0x20] sm:$0xff]
        %v211 = vld [vmem:[%s197 + $0x28] sm:$0xff]
        %v212 = vld [vmem:[%s197 + $0x30] sm:$0xff]
        %v213 = vld [vmem:[%s197 + $0x38] sm:$0xff]
        %v214 = vld [vmem:[%s2] sm:$0xff]
        %v215 = vld [vmem:[%s2 + $0x8] sm:$0xff]
        %v216 = vld [vmem:[%s2 + $0x10] sm:$0xff]
        %v217 = vld [vmem:[%s2 + $0x18] sm:$0xff]
        %v218 = vld [vmem:[%s2 + $0x20] sm:$0xff]
        %v219 = vld [vmem:[%s2 + $0x28] sm:$0xff]
        %221 = vset.pattern.permute.xlu0 0
        %222 = vperm.xlu0 %221, %v214
        %v223 = vpop.permute.xlu0 %222
        %226 = vset.pattern.permute.xlu0 0
        %227 = vperm.xlu0 %226, %v215
        %v228 = vpop.permute.xlu0 %227
        %231 = vset.pattern.permute.xlu0 0
        %232 = vperm.xlu0 %231, %v216
        %v233 = vpop.permute.xlu0 %232
        %236 = vset.pattern.permute.xlu0 0
        %237 = vperm.xlu0 %236, %v217
        %v238 = vpop.permute.xlu0 %237
        %241 = vset.pattern.permute.xlu0 0
        %242 = vperm.xlu0 %241, %v218
        %v243 = vpop.permute.xlu0 %242
        %246 = vset.pattern.permute.xlu0 0
        %247 = vperm.xlu0 %246, %v219
        %v248 = vpop.permute.xlu0 %247
        %vm250 = vcmask 261120
        %v252 = vsel %vm250, %v200, 0
        %v255 = vsel %vm250, %v201, 0
        %v258 = vsel %vm250, %v202, 0
        %v261 = vsel %vm250, %v203, 0
        %v264 = vsel %vm250, %v204, 0
        %v267 = vsel %vm250, %v205, 0
        %269 = vmatprep.subr.mxu0 %v207
        %270 = vmatpush1.msra.mxu0 %v206
        %271 = vmatprep.subr.mxu0 %v209
        %272 = vmatpush1.msra.mxu0 %v208
        %273 = vmatprep.subr.mxu0 %v211
        %274 = vmatpush1.msra.mxu0 %v210
        %275 = vmatprep.subr.mxu0 %v213
        %276 = vmatpush1.msra.mxu0 %v212
        %277 = vmatprep.subr.mxu0 0.0
        %278 = vmatpush1.msra.mxu0 0.0
        %279 = vmatprep.subr.mxu0 0.0
        %280 = vmatpush1.msra.mxu0 0.0
        %281 = vmatprep.subr.mxu0 0.0
        %282 = vmatpush1.msra.mxu0 0.0
        %283 = vmatprep.subr.mxu0 0.0
        %284 = vmatpush1.msra.mxu0 0.0
        %285 = vmatprep.subr.mxu0 0.0
        %286 = vmatpush1.msra.mxu0 0.0
        %287 = vmatprep.subr.mxu0 0.0
        %288 = vmatpush1.msra.mxu0 0.0
        %289 = vmatprep.subr.mxu0 0.0
        %290 = vmatpush1.msra.mxu0 0.0
        %291 = vmatprep.subr.mxu0 0.0
        %292 = vmatpush1.msra.mxu0 0.0
        %293 = vmatprep.subr.mxu0 0.0
        %294 = vmatpush1.msra.mxu0 0.0
        %295 = vmatprep.subr.mxu0 0.0
        %296 = vmatpush1.msra.mxu0 0.0
        %297 = vmatprep.subr.mxu0 0.0
        %298 = vmatpush1.msra.mxu0 0.0
        %299 = vmatprep.subr.mxu0 0.0
        %300 = vmatpush1.msra.mxu0 0.0
        %301 = vmatprep.subr.mxu0 0.0
        %302 = vmatpush1.msra.mxu0 0.0
        %303 = vmatprep.subr.mxu0 0.0
        %304 = vmatpush1.msra.mxu0 0.0
        %305 = vmatprep.subr.mxu0 0.0
        %306 = vmatpush1.msra.mxu0 0.0
        %307 = vmatprep.subr.mxu0 0.0
        %308 = vmatpush1.msra.mxu0 0.0
        %309 = vmatprep.subr.mxu0 0.0
        %310 = vmatpush1.msra.mxu0 0.0
        %311 = vmatprep.subr.mxu0 0.0
        %312 = vmatpush1.msra.mxu0 0.0
        %313 = vmatprep.subr.mxu0 0.0
        %314 = vmatpush1.msra.mxu0 0.0
        %315 = vmatprep.subr.mxu0 0.0
        %316 = vmatpush1.msra.mxu0 0.0
        %317 = vmatprep.subr.mxu0 0.0
        %318 = vmatpush1.msra.mxu0 0.0
        %319 = vmatprep.subr.mxu0 0.0
        %320 = vmatpush1.msra.mxu0 0.0
        %321 = vmatprep.subr.mxu0 0.0
        %322 = vmatpush1.msra.mxu0 0.0
        %323 = vmatprep.subr.mxu0 0.0
        %324 = vmatpush1.msra.mxu0 0.0
        %325 = vmatprep.subr.mxu0 0.0
        %326 = vmatpush1.msra.mxu0 0.0
        %327 = vmatprep.subr.mxu0 0.0
        %328 = vmatpush1.msra.mxu0 0.0
        %329 = vmatprep.subr.mxu0 0.0
        %330 = vmatpush1.msra.mxu0 0.0
        %331 = vmatprep.subr.mxu0 0.0
        %332 = vmatpush1.msra.mxu0 0.0
        %333 = vmatprep.mubr.f32.mxu0 0.0
        %334 = vmatmul.mubr.f32.gmra.mrb[0].mxu0 %v252
        %v335 = vpop.f32.mrb[0].mxu0
        %v336 = vadd.f32 %v223, %v335
        %v337 = vpop.f32.mrb[0].mxu0
        %v338 = vadd.f32 %v223, %v337
        %339 = vmatprep.mubr.f32.mxu0 0.0
        %340 = vmatmul.mubr.f32.gmra.mrb[0].mxu0 %v255
        %v341 = vpop.f32.mrb[0].mxu0
        %v342 = vadd.f32 %v228, %v341
        %v343 = vpop.f32.mrb[0].mxu0
        %v344 = vadd.f32 %v228, %v343
        %345 = vmatprep.mubr.f32.mxu0 0.0
        %346 = vmatmul.mubr.f32.gmra.mrb[0].mxu0 %v258
        %v347 = vpop.f32.mrb[0].mxu0
        %v348 = vadd.f32 %v233, %v347
        %v349 = vpop.f32.mrb[0].mxu0
        %v350 = vadd.f32 %v233, %v349
        %351 = vmatprep.mubr.f32.mxu0 0.0
        %352 = vmatmul.mubr.f32.gmra.mrb[0].mxu0 %v261
        %v353 = vpop.f32.mrb[0].mxu0
        %v354 = vadd.f32 %v238, %v353
        %v355 = vpop.f32.mrb[0].mxu0
        %v356 = vadd.f32 %v238, %v355
        %357 = vmatprep.mubr.f32.mxu0 0.0
        %358 = vmatmul.mubr.f32.gmra.mrb[0].mxu0 %v264
        %v359 = vpop.f32.mrb[0].mxu0
        %v360 = vadd.f32 %v243, %v359
        %v361 = vpop.f32.mrb[0].mxu0
        %v362 = vadd.f32 %v243, %v361
        %363 = vmatprep.mubr.f32.mxu0 0.0
        %364 = vmatmul.mubr.f32.gmra.mrb[0].mxu0 %v267
        %v365 = vpop.f32.mrb[0].mxu0
        %v366 = vadd.f32 %v248, %v365
        %v367 = vpop.f32.mrb[0].mxu0
        %v368 = vadd.f32 %v248, %v367
        %369 = vdwg.mxu0
        %370 = vst [vmem:[%s188] sm:$0xff] %v336
        %371 = vst [vmem:[%s188 + $0x8] sm:$0xff] %v338
        %372 = vst [vmem:[%s188 + $0x10] sm:$0xff] %v342
        %373 = vst [vmem:[%s188 + $0x18] sm:$0xff] %v344
        %374 = vst [vmem:[%s188 + $0x20] sm:$0xff] %v348
        %375 = vst [vmem:[%s188 + $0x28] sm:$0xff] %v350
        %376 = vst [vmem:[%s188 + $0x30] sm:$0xff] %v354
        %377 = vst [vmem:[%s188 + $0x38] sm:$0xff] %v356
        %378 = vst [vmem:[%s188 + $0x40] sm:$0xff] %v360
        %379 = vst [vmem:[%s188 + $0x48] sm:$0xff] %v362
        %380 = vst [vmem:[%s188 + $0x50] sm:$0xff] %v366
        %381 = vst [vmem:[%s188 + $0x58] sm:$0xff] %v368
        %s382 = sand.u32 %s109, 1
        %s383 = scalar_lea.sflag [#allocation3], %s382
        %s384 = sand.u32 %s109, 1
        %s385 = smul.addr %s384, 96
        %s386 = scalar_lea.vmem [#allocation2], %s385
        // Predicated region
        $region33: #{tpu_custom_call.1} parent=31 // pred_check
          %p387 = pneg %p119
        $region34: #{tpu_custom_call.1} parent=31 // pred_check_branch
          %389 = sbr.rel (%p387) target = $region36
        $region35: #{tpu_custom_call.1} parent=31 // pred_region
          %s390 = smul.u32 2, %s22
          %s392 = ssub.s32 1536, 1536
          %393 = vsyncadd %s383, %s392
          %s394 = smul.addr %s21, 12
          %s395 = sadd.s32 %s390, %s394
          %s396 = smul.addr %s395, 128
          %s397 = scalar_lea.hbm %s3, %s396
          %s398 = sshll.u32 %s386, 4
          %s399 = int_to_ptr.vmem [resolvable:$true] %s398
          %404 = dma.vmem_to_hbm [thread:$0]  %s399, 1536, %s397, %s383, 256, 256, 16
        $region36: #{tpu_custom_call.1} parent=31 // pred_fallthru
          _
      $region32: #{tpu_custom_call.1} parent=5 // pred_fallthru
        _
      %p405 = scmp.le.s32.totalorder 2, %s12
      // Predicated region
      $region37: #{tpu_custom_call.1} parent=5 // pred_check
        %p406 = pneg %p405
      $region38: #{tpu_custom_call.1} parent=5 // pred_check_branch
        %408 = sbr.rel (%p406) target = $region40
      $region39: #{tpu_custom_call.1} parent=5 // pred_region
        %s409 = ssub.s32 %s12, 2
        // Predicated region
        $region41: #{tpu_custom_call.1} parent=39 // pred_check
          %p410 = pneg %p125
        $region42: #{tpu_custom_call.1} parent=39 // pred_check_branch
          %412 = sbr.rel (%p410) target = $region44
        $region43: #{tpu_custom_call.1} parent=39 // pred_region
          %s413 = sand.u32 %s110, 1
          %s414 = scalar_lea.sflag [#allocation3], %s413
          %s415 = sand.u32 %s110, 1
          %s416 = smul.addr %s415, 96
          %s417 = scalar_lea.vmem [#allocation2], %s416
          %418 = dma.done %s414, 1536
        $region44: #{tpu_custom_call.1} parent=39 // pred_fallthru
          _
      $region40: #{tpu_custom_call.1} parent=5 // pred_fallthru
        _
    $region6: #{tpu_custom_call.1} parent=1 // loop_footer
      %s16 = sadd.s32 1, %s12
    $region7: #{tpu_custom_call.1} parent=1 // loop_footer_branch
      %11 = sbr.rel target = $region3
    $region8: #{tpu_custom_call.1} parent=1 // loop_exit
      _
    %419 = vsyncpa [#allocation3], 1
    %s420 = scalar_lea.sflag [#allocation3], 1
    %421 = vsyncpa %s420, 1

</llo_original>
